<compile_context>
chip_gen: v7x
topology: tpu7x:2x2x1
jax: 0.10.0
libtpu: 0.0.40
codegen_flags: <defaults>
</compile_context>

<pallas_src>
import functools
import math

import jax
import jax.numpy as jnp
from jax.experimental import pallas as pl
from jax.experimental.pallas import tpu as pltpu


def _round_up(n, m):
    return pl.cdiv(n, m) * m


def _fused_mlp_kernel(x_ref, *refs, num_layers):
    """x_ref: [TILE_M, K] bf16.  refs = (W1, b1, ..., WL, bL, out).

    Wi: [K_i, N_i] bf16 (resident in VMEM), bi: [1, N_i] f32, out: [TILE_M, N_L].
    Hidden activations stay on-chip (never written back to HBM).
    """
    *wb_refs, o_ref = refs
    h = x_ref[...]                                   # bf16 [TILE_M, K]
    for i in range(num_layers):
        w = wb_refs[2 * i][...]                      # bf16 [K_i, N_i]
        b = wb_refs[2 * i + 1][...]                  # f32  [1,  N_i]
        y = jnp.dot(h, w, preferred_element_type=jnp.float32) + b
        if i < num_layers - 1:
            h = jnp.maximum(y, 0.0).astype(jnp.bfloat16)
        else:
            o_ref[...] = y.astype(o_ref.dtype)


def fused_mlp(x2d, layers, *, tile_m=512, out_dtype=jnp.float32):
    """Run the full MLP in one pallas_call.

    x2d:    [M, input_dim] (bf16)
    layers: list of (W [in, out] bf16, b [1, out] f32)
    """
    M, K = x2d.shape
    num_layers = len(layers)
    out_dim = layers[-1][0].shape[1]

    # Largest M tile that is a multiple of 8 (sublane) and not bigger than M.
    tile_m = min(tile_m, _round_up(M, 8))
    m_pad = _round_up(M, tile_m)
    if m_pad != M:
        x2d = jnp.pad(x2d, ((0, m_pad - M), (0, 0)))

    grid = (m_pad // tile_m,)

    # x is tiled over M; every weight/bias uses a constant block index so it is
    # DMA'd once and stays resident in VMEM across all grid steps.
    in_specs = [pl.BlockSpec((tile_m, K), lambda i: (i, 0))]
    flat_args = [x2d]
    for (w, b) in layers:
        k_in, k_out = w.shape
        in_specs.append(pl.BlockSpec((k_in, k_out), lambda i: (0, 0)))
        in_specs.append(pl.BlockSpec((1, k_out), lambda i: (0, 0)))
        flat_args.extend([w, b])

    kernel = functools.partial(_fused_mlp_kernel, num_layers=num_layers)
    out = pl.pallas_call(
        kernel,
        out_shape=jax.ShapeDtypeStruct((m_pad, out_dim), out_dtype),
        grid=grid,
        in_specs=in_specs,
        out_specs=pl.BlockSpec((tile_m, out_dim), lambda i: (i, 0)),
        compiler_params=pltpu.CompilerParams(
            dimension_semantics=("parallel",),   # megacore sharding on v7x
        ),
    )(*flat_args)

    if m_pad != M:
        out = out[:M]
    return out


def init_mlp_params(key, input_dim, hidden_dim, output_dim, num_layers):
    """Deterministic init mirroring torch nn.Linear default (U(-1/sqrt(fan_in), ..)).

    Weights are stored in torch layout (out, in), f32 — like the nn.Module.
    """
    h = [hidden_dim] * (num_layers - 1)
    dims = list(zip([input_dim] + h, h + [output_dim]))
    params = []
    for n_in, n_out in dims:
        key, kw, kb = jax.random.split(key, 3)
        bound = 1.0 / (n_in ** 0.5)
        w = jax.random.uniform(kw, (n_out, n_in), jnp.float32, -bound, bound)
        b = jax.random.uniform(kb, (n_out,), jnp.float32, -bound, bound)
        params.append((w, b))
    return params


def prepare_params(params):
    """One-time prep: pre-transpose weights to (in, out) and cast to bf16.

    Doing this once (instead of W.T per forward call) avoids a per-layer
    transpose kernel and keeps the weight HBM layout lane-dense along N.
    """
    return [
        (w.T.astype(jnp.bfloat16), b.reshape(1, -1).astype(jnp.float32))
        for (w, b) in params
    ]


@functools.partial(jax.jit, static_argnames=("tile_m",))
def mlp_forward(x, prepared_params, tile_m=512):
    """Forward pass: x -> relu(L1(x)) -> ... -> L_last(x), one fused kernel."""
    leading = x.shape[:-1]
    m = math.prod(leading) if leading else 1
    x2d = x.reshape(m, x.shape[-1]).astype(jnp.bfloat16)
    out = fused_mlp(x2d, prepared_params, tile_m=tile_m, out_dtype=x.dtype)
    return out.reshape(*leading, out.shape[-1])


def mlp_reference(x, params):
    """Pure-JAX f32 reference (torch-layout params) for correctness checking."""
    num_layers = len(params)
    out = x
    for i, (w, b) in enumerate(params):
        out = out @ w.T + b
        if i < num_layers - 1:
            out = jnp.maximum(out, 0.0)
    return out


if __name__ == "__main__":
    key = jax.random.PRNGKey(0)
    k_x, k_p = jax.random.split(key)

    batch, seq, input_dim = 2, 8, 16
    hidden_dim, output_dim, num_layers = 32, 8, 3

    x = jax.random.normal(k_x, (batch, seq, input_dim), dtype=jnp.float32)
    params = init_mlp_params(k_p, input_dim, hidden_dim, output_dim, num_layers)
    prepared = prepare_params(params)

    y = mlp_forward(x, prepared)
    y = jax.block_until_ready(y)

    y_ref = mlp_reference(x, params)
    assert y.shape == (batch, seq, output_dim), y.shape
    # bf16 matmuls with f32 accumulation -> loosened tolerance vs f32 reference.
    assert jnp.allclose(y, y_ref, atol=2e-2, rtol=2e-2), "mismatch vs reference"

    print("KERNEL_OK")
</pallas_src>

<mosaic_0001>
module attributes {stable_mosaic.version = 11 : i64} {
  func.func @_fused_mlp_kernel(%arg0: i32, %arg1: memref<16x16xbf16, #tpu.memory_space<vmem>>, %arg2: memref<16x32xbf16, #tpu.memory_space<vmem>>, %arg3: memref<1x32xf32, #tpu.memory_space<vmem>>, %arg4: memref<32x32xbf16, #tpu.memory_space<vmem>>, %arg5: memref<1x32xf32, #tpu.memory_space<vmem>>, %arg6: memref<32x8xbf16, #tpu.memory_space<vmem>>, %arg7: memref<1x8xf32, #tpu.memory_space<vmem>>, %arg8: memref<16x8xf32, #tpu.memory_space<vmem>>) attributes {dimension_semantics = [#tpu.dimension_semantics<parallel>], iteration_bounds = array<i64: 1>, scalar_prefetch = 0 : i64, scratch_operands = 0 : i64, tpu.core_type = #tpu.core_type<tc>, window_params = [{transform_indices = @transform_0, window_bounds = array<i64: 16, 16>}, {pipeline_mode = #tpu.pipeline_mode<synchronous>, transform_indices = @transform_1, window_bounds = array<i64: 16, 32>}, {pipeline_mode = #tpu.pipeline_mode<synchronous>, transform_indices = @transform_2, window_bounds = array<i64: 1, 32>}, {pipeline_mode = #tpu.pipeline_mode<synchronous>, transform_indices = @transform_3, window_bounds = array<i64: 32, 32>}, {pipeline_mode = #tpu.pipeline_mode<synchronous>, transform_indices = @transform_4, window_bounds = array<i64: 1, 32>}, {pipeline_mode = #tpu.pipeline_mode<synchronous>, transform_indices = @transform_5, window_bounds = array<i64: 32, 8>}, {pipeline_mode = #tpu.pipeline_mode<synchronous>, transform_indices = @transform_6, window_bounds = array<i64: 1, 8>}, {transform_indices = @transform_7, window_bounds = array<i64: 16, 8>}]} {
    %c0 = arith.constant 0 : index
    %c0_0 = arith.constant 0 : index
    %0 = vector.load %arg1[%c0, %c0_0] : memref<16x16xbf16, #tpu.memory_space<vmem>>, vector<16x16xbf16>
    %c0_1 = arith.constant 0 : index
    %c0_2 = arith.constant 0 : index
    %1 = vector.load %arg2[%c0_1, %c0_2] : memref<16x32xbf16, #tpu.memory_space<vmem>>, vector<16x32xbf16>
    %c0_3 = arith.constant 0 : index
    %c0_4 = arith.constant 0 : index
    %2 = vector.load %arg3[%c0_3, %c0_4] : memref<1x32xf32, #tpu.memory_space<vmem>>, vector<1x32xf32>
    %cst = arith.constant dense<0.000000e+00> : vector<16x32xf32>
    %3 = tpu.matmul %0, %1, %cst {dimension_numbers = #tpu.dot_dimension_numbers<[1], [0], [0], [1], [0, 0, 1, 1], [], []>} : vector<16x16xbf16>, vector<16x32xbf16>, vector<16x32xf32> -> vector<16x32xf32>
    %4 = vector.broadcast %2 : vector<1x32xf32> to vector<16x32xf32>
    %5 = arith.addf %3, %4 : vector<16x32xf32>
    %cst_5 = arith.constant 0.000000e+00 : f32
    %6 = vector.broadcast %cst_5 : f32 to vector<16x32xf32>
    %7 = arith.maximumf %5, %6 : vector<16x32xf32>
    %8 = arith.truncf %7 : vector<16x32xf32> to vector<16x32xbf16>
    %c0_6 = arith.constant 0 : index
    %c0_7 = arith.constant 0 : index
    %9 = vector.load %arg4[%c0_6, %c0_7] : memref<32x32xbf16, #tpu.memory_space<vmem>>, vector<32x32xbf16>
    %c0_8 = arith.constant 0 : index
    %c0_9 = arith.constant 0 : index
    %10 = vector.load %arg5[%c0_8, %c0_9] : memref<1x32xf32, #tpu.memory_space<vmem>>, vector<1x32xf32>
    %cst_10 = arith.constant dense<0.000000e+00> : vector<16x32xf32>
    %11 = tpu.matmul %8, %9, %cst_10 {dimension_numbers = #tpu.dot_dimension_numbers<[1], [0], [0], [1], [0, 0, 1, 1], [], []>} : vector<16x32xbf16>, vector<32x32xbf16>, vector<16x32xf32> -> vector<16x32xf32>
    %12 = vector.broadcast %10 : vector<1x32xf32> to vector<16x32xf32>
    %13 = arith.addf %11, %12 : vector<16x32xf32>
    %cst_11 = arith.constant 0.000000e+00 : f32
    %14 = vector.broadcast %cst_11 : f32 to vector<16x32xf32>
    %15 = arith.maximumf %13, %14 : vector<16x32xf32>
    %16 = arith.truncf %15 : vector<16x32xf32> to vector<16x32xbf16>
    %c0_12 = arith.constant 0 : index
    %c0_13 = arith.constant 0 : index
    %17 = vector.load %arg6[%c0_12, %c0_13] : memref<32x8xbf16, #tpu.memory_space<vmem>>, vector<32x8xbf16>
    %c0_14 = arith.constant 0 : index
    %c0_15 = arith.constant 0 : index
    %18 = vector.load %arg7[%c0_14, %c0_15] : memref<1x8xf32, #tpu.memory_space<vmem>>, vector<1x8xf32>
    %cst_16 = arith.constant dense<0.000000e+00> : vector<16x8xf32>
    %19 = tpu.matmul %16, %17, %cst_16 {dimension_numbers = #tpu.dot_dimension_numbers<[1], [0], [0], [1], [0, 0, 1, 1], [], []>} : vector<16x32xbf16>, vector<32x8xbf16>, vector<16x8xf32> -> vector<16x8xf32>
    %20 = vector.broadcast %18 : vector<1x8xf32> to vector<16x8xf32>
    %21 = arith.addf %19, %20 : vector<16x8xf32>
    %c0_17 = arith.constant 0 : index
    %c0_18 = arith.constant 0 : index
    %22 = vector.load %arg8[%c0_17, %c0_18] : memref<16x8xf32, #tpu.memory_space<vmem>>, vector<16x8xf32>
    tpu.vector_store %arg8[%c0_17, %c0_18], %21 {strides = array<i32>} : memref<16x8xf32, #tpu.memory_space<vmem>>, vector<16x8xf32>,
    return
  }
  func.func @transform_0(%arg0: i32) -> (i32, i32) {
    %c0_i32 = arith.constant 0 : i32
    %c0_i32_0 = arith.constant 0 : i32
    return %arg0, %c0_i32 : i32, i32
  }
  func.func @transform_1(%arg0: i32) -> (i32, i32) {
    %c0_i32 = arith.constant 0 : i32
    %c0_i32_0 = arith.constant 0 : i32
    %c0_i32_1 = arith.constant 0 : i32
    return %c0_i32, %c0_i32_0 : i32, i32
  }
  func.func @transform_2(%arg0: i32) -> (i32, i32) {
    %c0_i32 = arith.constant 0 : i32
    %c0_i32_0 = arith.constant 0 : i32
    %c0_i32_1 = arith.constant 0 : i32
    return %c0_i32, %c0_i32_0 : i32, i32
  }
  func.func @transform_3(%arg0: i32) -> (i32, i32) {
    %c0_i32 = arith.constant 0 : i32
    %c0_i32_0 = arith.constant 0 : i32
    %c0_i32_1 = arith.constant 0 : i32
    return %c0_i32, %c0_i32_0 : i32, i32
  }
  func.func @transform_4(%arg0: i32) -> (i32, i32) {
    %c0_i32 = arith.constant 0 : i32
    %c0_i32_0 = arith.constant 0 : i32
    %c0_i32_1 = arith.constant 0 : i32
    return %c0_i32, %c0_i32_0 : i32, i32
  }
  func.func @transform_5(%arg0: i32) -> (i32, i32) {
    %c0_i32 = arith.constant 0 : i32
    %c0_i32_0 = arith.constant 0 : i32
    %c0_i32_1 = arith.constant 0 : i32
    return %c0_i32, %c0_i32_0 : i32, i32
  }
  func.func @transform_6(%arg0: i32) -> (i32, i32) {
    %c0_i32 = arith.constant 0 : i32
    %c0_i32_0 = arith.constant 0 : i32
    %c0_i32_1 = arith.constant 0 : i32
    return %c0_i32, %c0_i32_0 : i32, i32
  }
  func.func @transform_7(%arg0: i32) -> (i32, i32) {
    %c0_i32 = arith.constant 0 : i32
    %c0_i32_0 = arith.constant 0 : i32
    return %arg0, %c0_i32 : i32, i32
  }
}

</mosaic_0001>

<llo_original>
// kernel: mlp_forward.1
$region0: #{mlp_forward.1}
  #allocation0 [shape = 'u32[]', space=smem, size = 0x4, offset = 0x4, fixed_abs, tag = 'smem constant byte address 0x4 - core index']
  #allocation1 [shape = 'u32[144,128]{1,0:T(1,128)}', space=vmem, size = 0x12000, scoped, tag = 'internal scratch']
  %s0 = inlined_call_operand.vmem [shape: bf16[16,16], index: 0, kind: input, shape index: {}]
  %s1 = inlined_call_operand.vmem [shape: bf16[16,32], index: 1, kind: input, shape index: {}]
  %s2 = inlined_call_operand.vmem [shape: f32[1,32], index: 2, kind: input, shape index: {}]
  %s3 = inlined_call_operand.vmem [shape: bf16[32,32], index: 3, kind: input, shape index: {}]
  %s4 = inlined_call_operand.vmem [shape: f32[1,32], index: 4, kind: input, shape index: {}]
  %s5 = inlined_call_operand.vmem [shape: bf16[32,8], index: 5, kind: input, shape index: {}]
  %s6 = inlined_call_operand.vmem [shape: f32[1,8], index: 6, kind: input, shape index: {}]
  %s7 = inlined_call_operand.hbm [shape: f32[16,8], index: 7, kind: output, shape index: {}]
  %s8 = sld [smem:[#allocation0]]
  $region38: #{mlp_forward.1} parent=0
    _
  %s10 = ssub.s32 1, %s8
  %s11 = scalar_select 0, %s10, %s8
  $region1: #{mlp_forward.1} parent=0
    #allocation2 [shape = 'u8[8192]{0}', space=vmem, size = 0x2000, scoped, tag = 'output window, operand 0, single buffered']
    #allocation3 [shape = 's32[1]{0}', space=sflag, size = 0x4, scoped, tag = 'scoped memory for mlp_forward.1']
    %12 = vsyncpa [#allocation3], 0
    // Predicated region
    $region2: #{mlp_forward.1} parent=1 // pred_check
      _
    $region3: #{mlp_forward.1} parent=1 // pred_check_branch
      %14 = sbr.rel (0) target = $region5
    $region4: #{mlp_forward.1} parent=1 // pred_region
      _
    $region5: #{mlp_forward.1} parent=1 // pred_fallthru
      _
    // Predicated region
    $region6: #{mlp_forward.1} parent=1 // pred_check
      _
    $region7: #{mlp_forward.1} parent=1 // pred_check_branch
      %16 = sbr.rel (0) target = $region9
    $region8: #{mlp_forward.1} parent=1 // pred_region
      _
    $region9: #{mlp_forward.1} parent=1 // pred_fallthru
      _
    // Predicated region
    $region10: #{mlp_forward.1} parent=1 // pred_check
      _
    $region11: #{mlp_forward.1} parent=1 // pred_check_branch
      %18 = sbr.rel (0) target = $region13
    $region12: #{mlp_forward.1} parent=1 // pred_region
      _
    $region13: #{mlp_forward.1} parent=1 // pred_fallthru
      _
    // Predicated region
    $region14: #{mlp_forward.1} parent=1 // pred_check
      _
    $region15: #{mlp_forward.1} parent=1 // pred_check_branch
      %20 = sbr.rel (0) target = $region17
    $region16: #{mlp_forward.1} parent=1 // pred_region
      _
    $region17: #{mlp_forward.1} parent=1 // pred_fallthru
      _
    // Predicated region
    $region18: #{mlp_forward.1} parent=1 // pred_check
      _
    $region19: #{mlp_forward.1} parent=1 // pred_check_branch
      %22 = sbr.rel (0) target = $region21
    $region20: #{mlp_forward.1} parent=1 // pred_region
      _
    $region21: #{mlp_forward.1} parent=1 // pred_fallthru
      _
    // Predicated region
    $region22: #{mlp_forward.1} parent=1 // pred_check
      _
    $region23: #{mlp_forward.1} parent=1 // pred_check_branch
      %24 = sbr.rel (0) target = $region25
    $region24: #{mlp_forward.1} parent=1 // pred_region
      _
    $region25: #{mlp_forward.1} parent=1 // pred_fallthru
      _
    // Predicated region
    $region26: #{mlp_forward.1} parent=1 // pred_check
      _
    $region27: #{mlp_forward.1} parent=1 // pred_check_branch
      %26 = sbr.rel (0) target = $region29
    $region28: #{mlp_forward.1} parent=1 // pred_region
      _
    $region29: #{mlp_forward.1} parent=1 // pred_fallthru
      _
    %v28 = vld [vmem:[%s0] sm:$0xf]
    %v29 = vld [vmem:[%s0 + $0x4] sm:$0xf]
    %v30 = vld [vmem:[%s1] sm:$0xf]
    %v31 = vld [vmem:[%s1 + $0x4] sm:$0xf]
    %v32 = vld [vmem:[%s2] sm:$0x1]
    %v34 = vlaneseq
    %v35 = vshrl.u32 %v34, 7
    %v36 = vsub.s32 0, %v35
    %v37 = vrot.slane %v32, %v36
    %v41 = vunpack.c.l.b16 %v28
    %v42 = vunpack.c.l.b16 %v29
    %v43 = vpack.c.b16 %v42, %v41
    %v46 = vunpack.c.l.b16 %v30
    %v47 = vunpack.c.l.b16 %v31
    %v48 = vpack.c.b16 %v47, %v46
    %vm50 = vcmask 130048
    %v52 = vsel %vm50, %v43, 0
    %54 = vmatprep.subr.bf16.mxu0 0
    %55 = vmatpush1.bf16.msra.mxu0 %v48
    %56 = vmatprep.subr.bf16.mxu0 0
    %57 = vmatpush1.bf16.msra.mxu0 0
    %58 = vmatprep.subr.bf16.mxu0 0
    %59 = vmatpush1.bf16.msra.mxu0 0
    %60 = vmatprep.subr.bf16.mxu0 0
    %61 = vmatpush1.bf16.msra.mxu0 0
    %62 = vmatprep.subr.bf16.mxu0 0
    %63 = vmatpush1.bf16.msra.mxu0 0
    %64 = vmatprep.subr.bf16.mxu0 0
    %65 = vmatpush1.bf16.msra.mxu0 0
    %66 = vmatprep.subr.bf16.mxu0 0
    %67 = vmatpush1.bf16.msra.mxu0 0
    %68 = vmatprep.subr.bf16.mxu0 0
    %69 = vmatpush1.bf16.msra.mxu0 0
    %70 = vmatprep.subr.bf16.mxu0 0
    %71 = vmatpush1.bf16.msra.mxu0 0
    %72 = vmatprep.subr.bf16.mxu0 0
    %73 = vmatpush1.bf16.msra.mxu0 0
    %74 = vmatprep.subr.bf16.mxu0 0
    %75 = vmatpush1.bf16.msra.mxu0 0
    %76 = vmatprep.subr.bf16.mxu0 0
    %77 = vmatpush1.bf16.msra.mxu0 0
    %78 = vmatprep.subr.bf16.mxu0 0
    %79 = vmatpush1.bf16.msra.mxu0 0
    %80 = vmatprep.subr.bf16.mxu0 0
    %81 = vmatpush1.bf16.msra.mxu0 0
    %82 = vmatprep.subr.bf16.mxu0 0
    %83 = vmatpush1.bf16.msra.mxu0 0
    %84 = vmatprep.subr.bf16.mxu0 0
    %85 = vmatpush1.bf16.msra.mxu0 0
    %86 = vmatprep.mubr.bf16.mxu0 0
    %87 = vmatmul.mubr.bf16.gmra.mrb[0].mxu0 %v52
    %v88 = vpop.f32.mrb[0].mxu0
    %v89 = vadd.f32 %v37, %v88
    %v90 = vpop.f32.mrb[0].mxu0
    %v91 = vpop.f32.mrb[0].mxu0
    %v92 = vadd.f32 %v37, %v91
    %v93 = vpop.f32.mrb[0].mxu0
    %94 = vdwg.mxu0
    %v95 = vmax.f32 %v89, 0.0
    %v96 = vmax.f32 %v92, 0.0
    %v97 = vpack.c.bf16 %v96, %v95
    %v98 = vld [vmem:[%s3] sm:$0xf]
    %v99 = vld [vmem:[%s3 + $0x4] sm:$0xf]
    %v100 = vld [vmem:[%s3 + $0x8] sm:$0xf]
    %v101 = vld [vmem:[%s3 + $0xc] sm:$0xf]
    %v102 = vld [vmem:[%s4] sm:$0x1]
    %v104 = vlaneseq
    %v105 = vshrl.u32 %v104, 7
    %v106 = vsub.s32 0, %v105
    %v107 = vrot.slane %v102, %v106
    %v113 = vunpack.c.l.b16 %v98
    %v114 = vunpack.c.l.b16 %v99
    %v115 = vunpack.c.l.b16 %v100
    %v116 = vunpack.c.l.b16 %v101
    %v117 = vpack.c.b16 %v114, %v113
    %v118 = vpack.c.b16 %v116, %v115
    %vm121 = vcmask 261120
    %v123 = vsel %vm121, %v97, 0
    %125 = vmatprep.subr.bf16.mxu0 0
    %126 = vmatpush1.bf16.msra.mxu0 %v117
    %127 = vmatprep.subr.bf16.mxu0 0
    %128 = vmatpush1.bf16.msra.mxu0 %v118
    %129 = vmatprep.subr.bf16.mxu0 0
    %130 = vmatpush1.bf16.msra.mxu0 0
    %131 = vmatprep.subr.bf16.mxu0 0
    %132 = vmatpush1.bf16.msra.mxu0 0
    %133 = vmatprep.subr.bf16.mxu0 0
    %134 = vmatpush1.bf16.msra.mxu0 0
    %135 = vmatprep.subr.bf16.mxu0 0
    %136 = vmatpush1.bf16.msra.mxu0 0
    %137 = vmatprep.subr.bf16.mxu0 0
    %138 = vmatpush1.bf16.msra.mxu0 0
    %139 = vmatprep.subr.bf16.mxu0 0
    %140 = vmatpush1.bf16.msra.mxu0 0
    %141 = vmatprep.subr.bf16.mxu0 0
    %142 = vmatpush1.bf16.msra.mxu0 0
    %143 = vmatprep.subr.bf16.mxu0 0
    %144 = vmatpush1.bf16.msra.mxu0 0
    %145 = vmatprep.subr.bf16.mxu0 0
    %146 = vmatpush1.bf16.msra.mxu0 0
    %147 = vmatprep.subr.bf16.mxu0 0
    %148 = vmatpush1.bf16.msra.mxu0 0
    %149 = vmatprep.subr.bf16.mxu0 0
    %150 = vmatpush1.bf16.msra.mxu0 0
    %151 = vmatprep.subr.bf16.mxu0 0
    %152 = vmatpush1.bf16.msra.mxu0 0
    %153 = vmatprep.subr.bf16.mxu0 0
    %154 = vmatpush1.bf16.msra.mxu0 0
    %155 = vmatprep.subr.bf16.mxu0 0
    %156 = vmatpush1.bf16.msra.mxu0 0
    %157 = vmatprep.mubr.bf16.mxu0 0
    %158 = vmatmul.mubr.bf16.gmra.mrb[0].mxu0 %v123
    %v159 = vpop.f32.mrb[0].mxu0
    %v160 = vadd.f32 %v107, %v159
    %v161 = vpop.f32.mrb[0].mxu0
    %v162 = vpop.f32.mrb[0].mxu0
    %v163 = vadd.f32 %v107, %v162
    %v164 = vpop.f32.mrb[0].mxu0
    %165 = vdwg.mxu0
    %v166 = vmax.f32 %v160, 0.0
    %v167 = vmax.f32 %v163, 0.0
    %v168 = vpack.c.bf16 %v167, %v166
    %v169 = vld [vmem:[%s5] sm:$0xf]
    %v170 = vld [vmem:[%s5 + $0x4] sm:$0xf]
    %v171 = vld [vmem:[%s5 + $0x8] sm:$0xf]
    %v172 = vld [vmem:[%s5 + $0xc] sm:$0xf]
    %v173 = vld [vmem:[%s6] sm:$0x1]
    %v175 = vlaneseq
    %v176 = vshrl.u32 %v175, 7
    %v177 = vsub.s32 0, %v176
    %v178 = vrot.slane %v173, %v177
    %v184 = vunpack.c.l.b16 %v169
    %v185 = vunpack.c.l.b16 %v170
    %v186 = vunpack.c.l.b16 %v171
    %v187 = vunpack.c.l.b16 %v172
    %v188 = vpack.c.b16 %v185, %v184
    %v189 = vpack.c.b16 %v187, %v186
    %v193 = vsel %vm121, %v168, 0
    %195 = vmatprep.subr.bf16.mxu0 0
    %196 = vmatpush1.bf16.msra.mxu0 %v188
    %197 = vmatprep.subr.bf16.mxu0 0
    %198 = vmatpush1.bf16.msra.mxu0 %v189
    %199 = vmatprep.subr.bf16.mxu0 0
    %200 = vmatpush1.bf16.msra.mxu0 0
    %201 = vmatprep.subr.bf16.mxu0 0
    %202 = vmatpush1.bf16.msra.mxu0 0
    %203 = vmatprep.subr.bf16.mxu0 0
    %204 = vmatpush1.bf16.msra.mxu0 0
    %205 = vmatprep.subr.bf16.mxu0 0
    %206 = vmatpush1.bf16.msra.mxu0 0
    %207 = vmatprep.subr.bf16.mxu0 0
    %208 = vmatpush1.bf16.msra.mxu0 0
    %209 = vmatprep.subr.bf16.mxu0 0
    %210 = vmatpush1.bf16.msra.mxu0 0
    %211 = vmatprep.subr.bf16.mxu0 0
    %212 = vmatpush1.bf16.msra.mxu0 0
    %213 = vmatprep.subr.bf16.mxu0 0
    %214 = vmatpush1.bf16.msra.mxu0 0
    %215 = vmatprep.subr.bf16.mxu0 0
    %216 = vmatpush1.bf16.msra.mxu0 0
    %217 = vmatprep.subr.bf16.mxu0 0
    %218 = vmatpush1.bf16.msra.mxu0 0
    %219 = vmatprep.subr.bf16.mxu0 0
    %220 = vmatpush1.bf16.msra.mxu0 0
    %221 = vmatprep.subr.bf16.mxu0 0
    %222 = vmatpush1.bf16.msra.mxu0 0
    %223 = vmatprep.subr.bf16.mxu0 0
    %224 = vmatpush1.bf16.msra.mxu0 0
    %225 = vmatprep.subr.bf16.mxu0 0
    %226 = vmatpush1.bf16.msra.mxu0 0
    %227 = vmatprep.mubr.bf16.mxu0 0
    %228 = vmatmul.mubr.bf16.gmra.mrb[0].mxu0 %v193
    %v229 = vpop.f32.mrb[0].mxu0
    %v230 = vadd.f32 %v178, %v229
    %v231 = vpop.f32.mrb[0].mxu0
    %v232 = vpop.f32.mrb[0].mxu0
    %v233 = vadd.f32 %v178, %v232
    %v234 = vpop.f32.mrb[0].mxu0
    %235 = vdwg.mxu0
    %vm236 = vcmask 64512
    %237 = vst.msk [vmem:[#allocation2] sm:$0xff] %vm236, %v230
    %238 = vst.msk [vmem:[#allocation2 + $0x8] sm:$0xff] %vm236, %v233
    // Predicated region
    $region30: #{mlp_forward.1} parent=1 // pred_check
      _
    $region31: #{mlp_forward.1} parent=1 // pred_check_branch
      %240 = sbr.rel (0) target = $region33
    $region32: #{mlp_forward.1} parent=1 // pred_region
      %s242 = ssub.s32 256, 256
      %243 = vsyncadd [#allocation3], %s242
      %s244 = sshll.u32 [#allocation2], 4
      %s245 = int_to_ptr.vmem [resolvable:$true] %s244
      %250 = dma.vmem_to_hbm [thread:$0]  %s245, 256, %s7, [#allocation3], 128, 128, 8
    $region33: #{mlp_forward.1} parent=1 // pred_fallthru
      _
    // Predicated region
    $region34: #{mlp_forward.1} parent=1 // pred_check
      _
    $region35: #{mlp_forward.1} parent=1 // pred_check_branch
      %252 = sbr.rel (0) target = $region37
    $region36: #{mlp_forward.1} parent=1 // pred_region
      %253 = dma.done [#allocation3], 256
    $region37: #{mlp_forward.1} parent=1 // pred_fallthru
      _
    %254 = vsyncpa [#allocation3], 1

</llo_original>
